<compile_context>
chip_gen: v7x
topology: tpu7x:2x2x1
jax: 0.10.0
libtpu: 0.0.40
codegen_flags: <defaults>
</compile_context>

<pallas_src>
import functools

import jax
import jax.numpy as jnp
from jax.experimental import pallas as pl
from jax.experimental.pallas import tpu as pltpu


def _round_up(x, m):
    return (x + m - 1) // m * m


def char_cnn_kernel(chars_ref, m_ref, b_ref, o_ref, onehot_ref, *,
                    vocab_pad, word_len, kernel_size, out_ch_pad):
    """One grid step processes TN words (word index on lanes).

    chars_ref : (W, TN)              int32  VMEM  char ids
    m_ref     : (T*OC_pad, W*V_pad)  f32    VMEM  fused conv*embedding matrix
    b_ref     : (OC_pad, 1)          f32    VMEM  conv bias (column)
    o_ref     : (OC_pad, TN)         f32    VMEM  max-over-time output
    onehot_ref: (W*V_pad, TN)        f32    VMEM  scratch: one-hot char encoding
    """
    V = vocab_pad
    W = word_len
    K = kernel_size
    OCp = out_ch_pad
    T = W - K + 1
    TN = chars_ref.shape[1]
    cdt = onehot_ref.dtype

    c = chars_ref[...]                                           # (W, TN) int32
    v_iota = jax.lax.broadcasted_iota(jnp.int32, (V, TN), 0)     # (V, TN)

    # One-hot char encoding, staged through VMEM scratch so only one (V, TN)
    # compare slab is live at a time (caps vreg pressure).  V is a multiple of 8,
    # so every store is sublane-aligned and dense.
    for w in range(W):
        onehot_ref[w * V:(w + 1) * V, :] = (c[w:w + 1, :] == v_iota).astype(cdt)

    # Single MXU matmul = embedding gather + grouped/depthwise conv at all T
    # time positions:  y[t*OCp + o, n] = conv_out[o, t] for word n (bias excluded).
    y = jnp.dot(m_ref[...], onehot_ref[...],
                preferred_element_type=jnp.float32)              # (T*OCp, TN)

    # Max over time on sublane-aligned (OCp, TN) row blocks, bias, one dense store.
    acc = y[0:OCp, :]
    for t in range(1, T):
        acc = jnp.maximum(acc, y[t * OCp:(t + 1) * OCp, :])
    o_ref[...] = (acc + b_ref[...]).astype(o_ref.dtype)


def char_cnn_forward(chars, emb_table, conv_w, conv_b, *,
                     filter_num, kernel_size, tile_words=2048,
                     compute_dtype=jnp.float32):
    """chars: (B, S, W) int32. Returns (B, S, E*filter_num) float32 (eval-mode CharCNN)."""
    B, S, W = chars.shape
    V, E = emb_table.shape
    F, K = filter_num, kernel_size
    OC = E * F
    T = W - K + 1
    assert T >= 1, "word_len must be >= kernel_size"
    assert tile_words % 128 == 0

    # Pad vocab / out-channels to sublane multiples so every in-kernel slice and
    # store is tile-aligned (padded rows/cols of the fused matrix are zero).
    V_pad = _round_up(V, 8)
    OC_pad = _round_up(OC, 8)

    N = B * S
    # Words-on-lanes tile size; force >= 2 grid steps so v7x's two TensorCores each
    # get a "parallel" slice.  Keep tiles large for per-step overhead amortization.
    TN = max(128, min(tile_words, pl.cdiv(pl.cdiv(N, 2), 128) * 128))
    grid_n = max(2, pl.cdiv(N, TN))
    N_pad = grid_n * TN

    # Layout plumbing (cheap vs. kernel output traffic): (B, S, W) -> (W, N_pad).
    chars_t = chars.reshape(N, W).T.astype(jnp.int32)            # (W, N)
    chars_t = jnp.pad(chars_t, ((0, 0), (0, N_pad - N)))         # pad words with pad_idx=0

    # Fused weight matrix (computed once per call, ~(T*OC) x (W*V), tiny):
    #   M[t*OC_pad + o, w*V_pad + v] = 1[t <= w < t+K] * conv_w[o, 0, w-t] * emb[v, o // F]
    g = jnp.arange(OC) // F                                       # input channel per out channel
    emb_g = emb_table.astype(jnp.float32)[:, g]                   # (V, OC): emb[v, g(o)]
    cw = conv_w.astype(jnp.float32)[:, 0, :]                      # (OC, K)
    k_off = jnp.arange(W)[None, :] - jnp.arange(T)[:, None]       # (T, W): w - t
    valid = (k_off >= 0) & (k_off < K)                            # (T, W)
    coeff = cw[:, jnp.clip(k_off, 0, K - 1)].transpose(1, 0, 2)   # (T, OC, W): conv_w[o, w-t]
    coeff = jnp.where(valid[:, None, :], coeff, 0.0)
    m4 = coeff[:, :, :, None] * emb_g.T[None, :, None, :]         # (T, OC, W, V)
    m4 = jnp.pad(m4, ((0, 0), (0, OC_pad - OC), (0, 0), (0, V_pad - V)))
    m_fused = m4.reshape(T * OC_pad, W * V_pad).astype(compute_dtype)

    b_col = jnp.pad(conv_b.astype(jnp.float32), (0, OC_pad - OC)).reshape(OC_pad, 1)

    kernel = functools.partial(
        char_cnn_kernel, vocab_pad=V_pad, word_len=W,
        kernel_size=K, out_ch_pad=OC_pad)

    itemsize = jnp.dtype(compute_dtype).itemsize
    flops = 2 * N_pad * (T * OC_pad) * (W * V_pad) + N_pad * W * V_pad
    bytes_accessed = (4 * W * N_pad + 4 * OC_pad * N_pad
                      + grid_n * (itemsize * T * OC_pad * W * V_pad + 4 * OC_pad))

    out = pl.pallas_call(
        kernel,
        out_shape=jax.ShapeDtypeStruct((OC_pad, N_pad), jnp.float32),
        grid_spec=pltpu.PrefetchScalarGridSpec(
            num_scalar_prefetch=0,
            grid=(grid_n,),
            in_specs=[
                pl.BlockSpec((W, TN), lambda n: (0, n)),                  # TN words / step
                pl.BlockSpec((T * OC_pad, W * V_pad), lambda n: (0, 0)),  # fused weights (resident)
                pl.BlockSpec((OC_pad, 1), lambda n: (0, 0)),              # bias column (resident)
            ],
            out_specs=pl.BlockSpec((OC_pad, TN), lambda n: (0, n)),
            scratch_shapes=[pltpu.VMEM((W * V_pad, TN), compute_dtype)],  # one-hot staging
        ),
        compiler_params=pltpu.CompilerParams(
            dimension_semantics=("parallel",)),
        cost_estimate=pl.CostEstimate(flops=int(flops), transcendentals=0,
                                      bytes_accessed=int(bytes_accessed)),
    )(chars_t, m_fused, b_col)

    # Back to PyTorch's (B, S, OC); char_emb/cnn dropouts are identity (eval mode).
    return out[:OC, :N].T.reshape(B, S, OC)


def ref_forward(chars, emb_table, conv_w, conv_b, *, filter_num, kernel_size):
    """Pure-JAX reference matching PyTorch semantics (eval mode)."""
    x = jnp.take(emb_table, chars, axis=0).astype(jnp.float32)    # (B, S, W, E)
    B, S, W, E = x.shape
    OC = E * filter_num
    T = W - kernel_size + 1
    g = jnp.arange(OC) // filter_num
    xg = x[..., g]                                                # (B, S, W, OC)
    conv = sum(conv_w[:, 0, k].astype(jnp.float32) * xg[:, :, k:k + T, :]
               for k in range(kernel_size)) + conv_b.astype(jnp.float32)
    return jnp.max(conv, axis=2)                                  # (B, S, OC)


if __name__ == "__main__":
    # Module hyperparameters (small, consistent with CharCNN.__init__)
    char_emb_dim = 8          # E
    char_input_dim = 16       # char vocab size V
    char_cnn_filter_num = 4   # F
    char_cnn_kernel_size = 3  # K
    B, S, W = 2, 3, 8         # batch, sent_len, word_len

    key = jax.random.PRNGKey(0)
    k_emb, k_w, k_b, k_chars = jax.random.split(key, 4)

    emb_table = jax.random.normal(k_emb, (char_input_dim, char_emb_dim), jnp.float32)
    emb_table = emb_table.at[0].set(0.0)          # padding_idx = 0
    OC = char_emb_dim * char_cnn_filter_num
    conv_w = 0.1 * jax.random.normal(k_w, (OC, 1, char_cnn_kernel_size), jnp.float32)
    conv_b = 0.1 * jax.random.normal(k_b, (OC,), jnp.float32)
    chars = jax.random.randint(k_chars, (B, S, W), 0, char_input_dim, dtype=jnp.int32)

    out = char_cnn_forward(chars, emb_table, conv_w, conv_b,
                           filter_num=char_cnn_filter_num,
                           kernel_size=char_cnn_kernel_size)
    out = jax.block_until_ready(out)

    ref = ref_forward(chars, emb_table, conv_w, conv_b,
                      filter_num=char_cnn_filter_num,
                      kernel_size=char_cnn_kernel_size)
    assert out.shape == (B, S, OC), out.shape
    # Tolerance allows for MXU f32 matmul pass decomposition; genuine logic errors
    # would show up as O(0.1..1) mismatches.
    assert jnp.allclose(out, ref, atol=1e-2, rtol=1e-2), "mismatch vs reference"

    print("KERNEL_OK")
</pallas_src>

<mosaic_0001>
module attributes {stable_mosaic.version = 11 : i64} {
  func.func @char_cnn_kernel(%arg0: i32, %arg1: memref<8x128xi32, #tpu.memory_space<vmem>>, %arg2: memref<192x128xf32, #tpu.memory_space<vmem>>, %arg3: memref<32x1xf32, #tpu.memory_space<vmem>>, %arg4: memref<32x128xf32, #tpu.memory_space<vmem>>, %arg5: memref<128x128xf32, #tpu.memory_space<vmem>>) attributes {dimension_semantics = [#tpu.dimension_semantics<parallel>], iteration_bounds = array<i64: 2>, scalar_prefetch = 0 : i64, scratch_operands = 1 : i64, tpu.core_type = #tpu.core_type<tc>, window_params = [{transform_indices = @transform_0, window_bounds = array<i64: 8, 128>}, {pipeline_mode = #tpu.pipeline_mode<synchronous>, transform_indices = @transform_1, window_bounds = array<i64: 192, 128>}, {pipeline_mode = #tpu.pipeline_mode<synchronous>, transform_indices = @transform_2, window_bounds = array<i64: 32, 1>}, {transform_indices = @transform_3, window_bounds = array<i64: 32, 128>}]} {
    %c0 = arith.constant 0 : index
    %c0_0 = arith.constant 0 : index
    %0 = vector.load %arg1[%c0, %c0_0] : memref<8x128xi32, #tpu.memory_space<vmem>>, vector<8x128xi32>
    %1 = tpu.iota {dimensions = array<i32: 0>} : vector<16x128xi32>
    %2 = vector.extract_strided_slice %0 {offsets = [0, 0], sizes = [1, 128], strides = [1, 1]} : vector<8x128xi32> to vector<1x128xi32>
    %3 = vector.broadcast %2 : vector<1x128xi32> to vector<16x128xi32>
    %4 = arith.cmpi eq, %3, %1 : vector<16x128xi32>
    %5 = arith.extui %4 : vector<16x128xi1> to vector<16x128xi32>
    %6 = arith.sitofp %5 : vector<16x128xi32> to vector<16x128xf32>
    %c0_1 = arith.constant 0 : index
    %c0_2 = arith.constant 0 : index
    %7 = vector.load %arg5[%c0_1, %c0_2] : memref<128x128xf32, #tpu.memory_space<vmem>>, vector<16x128xf32>
    tpu.vector_store %arg5[%c0_1, %c0_2], %6 {strides = array<i32>} : memref<128x128xf32, #tpu.memory_space<vmem>>, vector<16x128xf32>,
    %8 = vector.extract_strided_slice %0 {offsets = [1, 0], sizes = [1, 128], strides = [1, 1]} : vector<8x128xi32> to vector<1x128xi32>
    %9 = vector.broadcast %8 : vector<1x128xi32> to vector<16x128xi32>
    %10 = arith.cmpi eq, %9, %1 : vector<16x128xi32>
    %11 = arith.extui %10 : vector<16x128xi1> to vector<16x128xi32>
    %12 = arith.sitofp %11 : vector<16x128xi32> to vector<16x128xf32>
    %c16 = arith.constant 16 : index
    %c0_3 = arith.constant 0 : index
    %13 = vector.load %arg5[%c16, %c0_3] : memref<128x128xf32, #tpu.memory_space<vmem>>, vector<16x128xf32>
    tpu.vector_store %arg5[%c16, %c0_3], %12 {strides = array<i32>} : memref<128x128xf32, #tpu.memory_space<vmem>>, vector<16x128xf32>,
    %14 = vector.extract_strided_slice %0 {offsets = [2, 0], sizes = [1, 128], strides = [1, 1]} : vector<8x128xi32> to vector<1x128xi32>
    %15 = vector.broadcast %14 : vector<1x128xi32> to vector<16x128xi32>
    %16 = arith.cmpi eq, %15, %1 : vector<16x128xi32>
    %17 = arith.extui %16 : vector<16x128xi1> to vector<16x128xi32>
    %18 = arith.sitofp %17 : vector<16x128xi32> to vector<16x128xf32>
    %c32 = arith.constant 32 : index
    %c0_4 = arith.constant 0 : index
    %19 = vector.load %arg5[%c32, %c0_4] : memref<128x128xf32, #tpu.memory_space<vmem>>, vector<16x128xf32>
    tpu.vector_store %arg5[%c32, %c0_4], %18 {strides = array<i32>} : memref<128x128xf32, #tpu.memory_space<vmem>>, vector<16x128xf32>,
    %20 = vector.extract_strided_slice %0 {offsets = [3, 0], sizes = [1, 128], strides = [1, 1]} : vector<8x128xi32> to vector<1x128xi32>
    %21 = vector.broadcast %20 : vector<1x128xi32> to vector<16x128xi32>
    %22 = arith.cmpi eq, %21, %1 : vector<16x128xi32>
    %23 = arith.extui %22 : vector<16x128xi1> to vector<16x128xi32>
    %24 = arith.sitofp %23 : vector<16x128xi32> to vector<16x128xf32>
    %c48 = arith.constant 48 : index
    %c0_5 = arith.constant 0 : index
    %25 = vector.load %arg5[%c48, %c0_5] : memref<128x128xf32, #tpu.memory_space<vmem>>, vector<16x128xf32>
    tpu.vector_store %arg5[%c48, %c0_5], %24 {strides = array<i32>} : memref<128x128xf32, #tpu.memory_space<vmem>>, vector<16x128xf32>,
    %26 = vector.extract_strided_slice %0 {offsets = [4, 0], sizes = [1, 128], strides = [1, 1]} : vector<8x128xi32> to vector<1x128xi32>
    %27 = vector.broadcast %26 : vector<1x128xi32> to vector<16x128xi32>
    %28 = arith.cmpi eq, %27, %1 : vector<16x128xi32>
    %29 = arith.extui %28 : vector<16x128xi1> to vector<16x128xi32>
    %30 = arith.sitofp %29 : vector<16x128xi32> to vector<16x128xf32>
    %c64 = arith.constant 64 : index
    %c0_6 = arith.constant 0 : index
    %31 = vector.load %arg5[%c64, %c0_6] : memref<128x128xf32, #tpu.memory_space<vmem>>, vector<16x128xf32>
    tpu.vector_store %arg5[%c64, %c0_6], %30 {strides = array<i32>} : memref<128x128xf32, #tpu.memory_space<vmem>>, vector<16x128xf32>,
    %32 = vector.extract_strided_slice %0 {offsets = [5, 0], sizes = [1, 128], strides = [1, 1]} : vector<8x128xi32> to vector<1x128xi32>
    %33 = vector.broadcast %32 : vector<1x128xi32> to vector<16x128xi32>
    %34 = arith.cmpi eq, %33, %1 : vector<16x128xi32>
    %35 = arith.extui %34 : vector<16x128xi1> to vector<16x128xi32>
    %36 = arith.sitofp %35 : vector<16x128xi32> to vector<16x128xf32>
    %c80 = arith.constant 80 : index
    %c0_7 = arith.constant 0 : index
    %37 = vector.load %arg5[%c80, %c0_7] : memref<128x128xf32, #tpu.memory_space<vmem>>, vector<16x128xf32>
    tpu.vector_store %arg5[%c80, %c0_7], %36 {strides = array<i32>} : memref<128x128xf32, #tpu.memory_space<vmem>>, vector<16x128xf32>,
    %38 = vector.extract_strided_slice %0 {offsets = [6, 0], sizes = [1, 128], strides = [1, 1]} : vector<8x128xi32> to vector<1x128xi32>
    %39 = vector.broadcast %38 : vector<1x128xi32> to vector<16x128xi32>
    %40 = arith.cmpi eq, %39, %1 : vector<16x128xi32>
    %41 = arith.extui %40 : vector<16x128xi1> to vector<16x128xi32>
    %42 = arith.sitofp %41 : vector<16x128xi32> to vector<16x128xf32>
    %c96 = arith.constant 96 : index
    %c0_8 = arith.constant 0 : index
    %43 = vector.load %arg5[%c96, %c0_8] : memref<128x128xf32, #tpu.memory_space<vmem>>, vector<16x128xf32>
    tpu.vector_store %arg5[%c96, %c0_8], %42 {strides = array<i32>} : memref<128x128xf32, #tpu.memory_space<vmem>>, vector<16x128xf32>,
    %44 = vector.extract_strided_slice %0 {offsets = [7, 0], sizes = [1, 128], strides = [1, 1]} : vector<8x128xi32> to vector<1x128xi32>
    %45 = vector.broadcast %44 : vector<1x128xi32> to vector<16x128xi32>
    %46 = arith.cmpi eq, %45, %1 : vector<16x128xi32>
    %47 = arith.extui %46 : vector<16x128xi1> to vector<16x128xi32>
    %48 = arith.sitofp %47 : vector<16x128xi32> to vector<16x128xf32>
    %c112 = arith.constant 112 : index
    %c0_9 = arith.constant 0 : index
    %49 = vector.load %arg5[%c112, %c0_9] : memref<128x128xf32, #tpu.memory_space<vmem>>, vector<16x128xf32>
    tpu.vector_store %arg5[%c112, %c0_9], %48 {strides = array<i32>} : memref<128x128xf32, #tpu.memory_space<vmem>>, vector<16x128xf32>,
    %c0_10 = arith.constant 0 : index
    %c0_11 = arith.constant 0 : index
    %50 = vector.load %arg2[%c0_10, %c0_11] : memref<192x128xf32, #tpu.memory_space<vmem>>, vector<192x128xf32>
    %c0_12 = arith.constant 0 : index
    %c0_13 = arith.constant 0 : index
    %51 = vector.load %arg5[%c0_12, %c0_13] : memref<128x128xf32, #tpu.memory_space<vmem>>, vector<128x128xf32>
    %cst = arith.constant dense<0.000000e+00> : vector<192x128xf32>
    %52 = tpu.matmul %50, %51, %cst {dimension_numbers = #tpu.dot_dimension_numbers<[1], [0], [0], [1], [0, 0, 1, 1], [], []>} : vector<192x128xf32>, vector<128x128xf32>, vector<192x128xf32> -> vector<192x128xf32>
    %53 = vector.extract_strided_slice %52 {offsets = [0, 0], sizes = [32, 128], strides = [1, 1]} : vector<192x128xf32> to vector<32x128xf32>
    %54 = vector.extract_strided_slice %52 {offsets = [32, 0], sizes = [32, 128], strides = [1, 1]} : vector<192x128xf32> to vector<32x128xf32>
    %55 = arith.maximumf %53, %54 : vector<32x128xf32>
    %56 = vector.extract_strided_slice %52 {offsets = [64, 0], sizes = [32, 128], strides = [1, 1]} : vector<192x128xf32> to vector<32x128xf32>
    %57 = arith.maximumf %55, %56 : vector<32x128xf32>
    %58 = vector.extract_strided_slice %52 {offsets = [96, 0], sizes = [32, 128], strides = [1, 1]} : vector<192x128xf32> to vector<32x128xf32>
    %59 = arith.maximumf %57, %58 : vector<32x128xf32>
    %60 = vector.extract_strided_slice %52 {offsets = [128, 0], sizes = [32, 128], strides = [1, 1]} : vector<192x128xf32> to vector<32x128xf32>
    %61 = arith.maximumf %59, %60 : vector<32x128xf32>
    %62 = vector.extract_strided_slice %52 {offsets = [160, 0], sizes = [32, 128], strides = [1, 1]} : vector<192x128xf32> to vector<32x128xf32>
    %63 = arith.maximumf %61, %62 : vector<32x128xf32>
    %c0_14 = arith.constant 0 : index
    %c0_15 = arith.constant 0 : index
    %64 = vector.load %arg3[%c0_14, %c0_15] : memref<32x1xf32, #tpu.memory_space<vmem>>, vector<32x1xf32>
    %65 = vector.broadcast %64 : vector<32x1xf32> to vector<32x128xf32>
    %66 = arith.addf %63, %65 : vector<32x128xf32>
    %c0_16 = arith.constant 0 : index
    %c0_17 = arith.constant 0 : index
    %67 = vector.load %arg4[%c0_16, %c0_17] : memref<32x128xf32, #tpu.memory_space<vmem>>, vector<32x128xf32>
    tpu.vector_store %arg4[%c0_16, %c0_17], %66 {strides = array<i32>} : memref<32x128xf32, #tpu.memory_space<vmem>>, vector<32x128xf32>,
    return
  }
  func.func @transform_0(%arg0: i32) -> (i32, i32) {
    %c0_i32 = arith.constant 0 : i32
    %c0_i32_0 = arith.constant 0 : i32
    return %c0_i32, %arg0 : i32, i32
  }
  func.func @transform_1(%arg0: i32) -> (i32, i32) {
    %c0_i32 = arith.constant 0 : i32
    %c0_i32_0 = arith.constant 0 : i32
    %c0_i32_1 = arith.constant 0 : i32
    return %c0_i32, %c0_i32_0 : i32, i32
  }
  func.func @transform_2(%arg0: i32) -> (i32, i32) {
    %c0_i32 = arith.constant 0 : i32
    %c0_i32_0 = arith.constant 0 : i32
    %c0_i32_1 = arith.constant 0 : i32
    return %c0_i32, %c0_i32_0 : i32, i32
  }
  func.func @transform_3(%arg0: i32) -> (i32, i32) {
    %c0_i32 = arith.constant 0 : i32
    %c0_i32_0 = arith.constant 0 : i32
    return %c0_i32, %arg0 : i32, i32
  }
}

</mosaic_0001>

<llo_original>
// kernel: tpu_custom_call.1
$region0: #{tpu_custom_call.1}
  #allocation0 [shape = 'u32[]', space=smem, size = 0x4, offset = 0x4, fixed_abs, tag = 'smem constant byte address 0x4 - core index']
  #allocation1 [shape = 'u32[144,128]{1,0:T(1,128)}', space=vmem, size = 0x12000, scoped, tag = 'internal scratch']
  #allocation2 [shape = 'f32[128,128]{1,0:T(8,128)}', space=vmem, size = 0x10000, scoped, tag = 'scratch operand']
  %s0 = inlined_call_operand.vmem [shape: s32[8,256], index: 0, kind: input, shape index: {}]
  %s1 = inlined_call_operand.hbm [shape: f32[192,128], index: 1, kind: input, shape index: {}]
  %s2 = inlined_call_operand.vmem [shape: f32[32,1], index: 2, kind: input, shape index: {}]
  %s3 = inlined_call_operand.hbm [shape: f32[32,256], index: 3, kind: output, shape index: {}]
  %s4 = sld [smem:[#allocation0]]
  $region49: #{tpu_custom_call.1} parent=0
    _
  %s6 = ssub.s32 1, %s4
  %s7 = scalar_select 0, %s6, %s4
  $region1: #{tpu_custom_call.1} parent=0
    #allocation3 [shape = 'u8[98304]{0}', space=vmem, size = 0x18000, scoped, tag = 'input window, operand 1, single buffered']
    #allocation4 [shape = 's32[2]{0}', space=sflag, size = 0x8, scoped, tag = 'scoped memory for tpu_custom_call.1']
    #allocation5 [shape = 's32[2]{0}', space=sflag, size = 0x8, scoped, tag = 'scoped memory for tpu_custom_call.1']
    #allocation6 [shape = 'u8[32768]{0}', space=vmem, size = 0x8000, scoped, tag = 'output window, operand 0']
    %8 = vsyncpa [#allocation4], 0
    %9 = vsyncpa [#allocation5], 0
    %s10 = scalar_lea.sflag [#allocation5], 1
    %11 = vsyncpa %s10, 0
    loop: start=0, step=1, limit=4
    $region2: #{tpu_custom_call.1} parent=1 // loop_pre_header
      _
    $region3: #{tpu_custom_call.1} parent=1 // loop_header
      %s13 = sphi 0, %s17
      %p14 = scmp.ge.s32.totalorder %s13, 4
      %s23 = sphi 0, %s25
      %s26 = sphi 0, %s23
      %s27 = sphi 0, %s26
      %s43 = sphi 0, %s27
      %s47 = sphi 0, %s47
      %s49 = sphi 0, %s47
      %s50 = sphi 0, %s49
      %s64 = sphi 0, %s50
      %s68 = sphi 0, %s68
      %s70 = sphi 0, %s68
      %s71 = sphi 0, %s70
      %s85 = sphi 0, %s71
      %s91 = sphi 0, %s93
      %s94 = sphi 0, %s91
      %s95 = sphi 0, %s94
      %s111 = sphi 0, %s95
    $region4: #{tpu_custom_call.1} parent=1 // loop_header_branch
      %16 = sbr.rel (%p14) target = $region8
    $region5: #{tpu_custom_call.1} parent=1 // loop_body
      %s18 = ssub.s32 %s13, 1
      %s19 = ssub.s32 %s13, 2
      %s20 = sadd.s32 %s13, 1
      %s21 = ssub.s32 %s13, %s20
      %p22 = scmp.eq.s32.totalorder %s21, 0
      %s24 = sadd.s32 %s23, 1
      %s25 = scalar_select %p22, %s23, %s24
      %p28 = pneg %p22
      %p29 = scmp.eq.s32.totalorder %s13, 1
      %p30 = por %p28, %p29
      %p31 = scmp.ne.s32.totalorder %s23, %s26
      %p32 = scmp.eq.s32.totalorder %s13, 0
      %p33 = por %p31, %p32
      %p34 = scmp.ne.s32.totalorder %s23, %s26
      %p35 = scmp.eq.s32.totalorder %s18, 1
      %p36 = por %p34, %p35
      %p37 = scmp.ne.s32.totalorder %s26, %s27
      %p38 = scmp.eq.s32.totalorder %s18, 0
      %p39 = por %p37, %p38
      %p40 = scmp.ne.s32.totalorder %s26, %s27
      %p41 = scmp.eq.s32.totalorder %s19, 1
      %p42 = por %p40, %p41
      %p44 = scmp.ne.s32.totalorder %s27, %s43
      %p45 = scmp.eq.s32.totalorder %s19, 0
      %p46 = por %p44, %p45
      %s48 = sadd.s32 %s47, 1
      %p51 = scmp.eq.s32.totalorder %s13, 1
      %p52 = scmp.ne.s32.totalorder %s47, %s49
      %p53 = scmp.eq.s32.totalorder %s13, 0
      %p54 = por %p52, %p53
      %p55 = scmp.ne.s32.totalorder %s47, %s49
      %p56 = scmp.eq.s32.totalorder %s18, 1
      %p57 = por %p55, %p56
      %p58 = scmp.ne.s32.totalorder %s49, %s50
      %p59 = scmp.eq.s32.totalorder %s18, 0
      %p60 = por %p58, %p59
      %p61 = scmp.ne.s32.totalorder %s49, %s50
      %p62 = scmp.eq.s32.totalorder %s19, 1
      %p63 = por %p61, %p62
      %p65 = scmp.ne.s32.totalorder %s50, %s64
      %p66 = scmp.eq.s32.totalorder %s19, 0
      %p67 = por %p65, %p66
      %s69 = sadd.s32 %s68, 1
      %p72 = scmp.eq.s32.totalorder %s13, 1
      %p73 = scmp.ne.s32.totalorder %s68, %s70
      %p74 = scmp.eq.s32.totalorder %s13, 0
      %p75 = por %p73, %p74
      %p76 = scmp.ne.s32.totalorder %s68, %s70
      %p77 = scmp.eq.s32.totalorder %s18, 1
      %p78 = por %p76, %p77
      %p79 = scmp.ne.s32.totalorder %s70, %s71
      %p80 = scmp.eq.s32.totalorder %s18, 0
      %p81 = por %p79, %p80
      %p82 = scmp.ne.s32.totalorder %s70, %s71
      %p83 = scmp.eq.s32.totalorder %s19, 1
      %p84 = por %p82, %p83
      %p86 = scmp.ne.s32.totalorder %s71, %s85
      %p87 = scmp.eq.s32.totalorder %s19, 0
      %p88 = por %p86, %p87
      %s89 = ssub.s32 %s13, %s20
      %p90 = scmp.eq.s32.totalorder %s89, 0
      %s92 = sadd.s32 %s91, 1
      %s93 = scalar_select %p90, %s91, %s92
      %p96 = pneg %p90
      %p97 = scmp.eq.s32.totalorder %s13, 1
      %p98 = por %p96, %p97
      %p99 = scmp.ne.s32.totalorder %s91, %s94
      %p100 = scmp.eq.s32.totalorder %s13, 0
      %p101 = por %p99, %p100
      %p102 = scmp.ne.s32.totalorder %s91, %s94
      %p103 = scmp.eq.s32.totalorder %s18, 1
      %p104 = por %p102, %p103
      %p105 = scmp.ne.s32.totalorder %s94, %s95
      %p106 = scmp.eq.s32.totalorder %s18, 0
      %p107 = por %p105, %p106
      %p108 = scmp.ne.s32.totalorder %s94, %s95
      %p109 = scmp.eq.s32.totalorder %s19, 1
      %p110 = por %p108, %p109
      %p112 = scmp.ne.s32.totalorder %s95, %s111
      %p113 = scmp.eq.s32.totalorder %s19, 0
      %p114 = por %p112, %p113
      %p115 = scmp.le.s32.totalorder 1, %s13
      %p116 = scmp.lt.s32.totalorder %s13, 3
      %p117 = pnand %p115, %p116
      %p118 = pneg %p117
      // Predicated region
      $region9: #{tpu_custom_call.1} parent=5 // pred_check
        _
      $region10: #{tpu_custom_call.1} parent=5 // pred_check_branch
        %120 = sbr.rel (%p117) target = $region12
      $region11: #{tpu_custom_call.1} parent=5 // pred_region
        %s121 = ssub.s32 %s13, 1
        // Predicated region
        $region13: #{tpu_custom_call.1} parent=11 // pred_check
          %p122 = pneg %p60
        $region14: #{tpu_custom_call.1} parent=11 // pred_check_branch
          %124 = sbr.rel (%p122) target = $region16
        $region15: #{tpu_custom_call.1} parent=11 // pred_region
          %s126 = ssub.s32 3072, 3072
          %127 = vsyncadd [#allocation4], %s126
          %s128 = sshll.u32 [#allocation3], 4
          %s129 = int_to_ptr.vmem [resolvable:$true] %s128
          %134 = dma.hbm_to_vmem [thread:$0]  %s1, 3072, %s129, [#allocation4], 128, 128, 8
        $region16: #{tpu_custom_call.1} parent=11 // pred_fallthru
          _
        // Predicated region
        $region17: #{tpu_custom_call.1} parent=11 // pred_check
          %p135 = pneg %p81
        $region18: #{tpu_custom_call.1} parent=11 // pred_check_branch
          %137 = sbr.rel (%p135) target = $region20
        $region19: #{tpu_custom_call.1} parent=11 // pred_region
          _
        $region20: #{tpu_custom_call.1} parent=11 // pred_fallthru
          _
      $region12: #{tpu_custom_call.1} parent=5 // pred_fallthru
        _
      %p138 = scmp.lt.s32.totalorder %s13, 2
      // Predicated region
      $region21: #{tpu_custom_call.1} parent=5 // pred_check
        %p139 = pneg %p138
      $region22: #{tpu_custom_call.1} parent=5 // pred_check_branch
        %141 = sbr.rel (%p139) target = $region24
      $region23: #{tpu_custom_call.1} parent=5 // pred_region
        // Predicated region
        $region25: #{tpu_custom_call.1} parent=23 // pred_check
          %p142 = pneg %p33
        $region26: #{tpu_custom_call.1} parent=23 // pred_check_branch
          %144 = sbr.rel (%p142) target = $region28
        $region27: #{tpu_custom_call.1} parent=23 // pred_region
          %p145 = scmp.lt.s32.totalorder %s13, 1
          %s146 = scalar_select %p145, %s13, 1
          %s147 = smul.addr %s146, 8
          %s148 = scalar_lea.vmem %s0, %s147
        $region28: #{tpu_custom_call.1} parent=23 // pred_fallthru
          _
      $region24: #{tpu_custom_call.1} parent=5 // pred_fallthru
        _
      %p149 = scmp.le.s32.totalorder 1, %s13
      %p150 = scmp.lt.s32.totalorder %s13, 3
      %p151 = pnand %p149, %p150
      %p152 = pneg %p151
      // Predicated region
      $region29: #{tpu_custom_call.1} parent=5 // pred_check
        _
      $region30: #{tpu_custom_call.1} parent=5 // pred_check_branch
        %154 = sbr.rel (%p151) target = $region32
      $region31: #{tpu_custom_call.1} parent=5 // pred_region
        %s155 = ssub.s32 %s13, 1
        // Predicated region
        $region33: #{tpu_custom_call.1} parent=31 // pred_check
          %p156 = pneg %p60
        $region34: #{tpu_custom_call.1} parent=31 // pred_check_branch
          %158 = sbr.rel (%p156) target = $region36
        $region35: #{tpu_custom_call.1} parent=31 // pred_region
          %159 = dma.done [#allocation4], 3072
        $region36: #{tpu_custom_call.1} parent=31 // pred_fallthru
          _
        %p160 = scmp.lt.s32.totalorder %s18, 1
        %s161 = scalar_select %p160, %s18, 1
        %s162 = smul.addr %s161, 8
        %s163 = scalar_lea.vmem %s0, %s162
        %p164 = pneg %p39
        %p165 = pneg %p36
        %p166 = pneg %p60
        %p167 = pneg %p57
        %p168 = pneg %p81
        %p169 = pneg %p78
        %p170 = pneg %p107
        %p171 = pneg %p104
        %s172 = sand.u32 %s94, 1
        %s173 = scalar_lea.sflag [#allocation5], %s172
        %s174 = sand.u32 %s94, 1
        %s175 = smul.addr %s174, 32
        %s176 = scalar_lea.vmem [#allocation6], %s175
        %p177 = scmp.lt.s32.totalorder %s18, 1
        %s178 = scalar_select %p177, %s18, 1
        %s179 = smul.addr %s178, 8
        %s180 = scalar_lea.vmem %s0, %s179
        %v181 = vld [vmem:[%s180] sm:$0xff]
        %v182 = vlaneseq
        %v183 = vshrl.u32 %v182, 7
        %v184 = vadd.s32 %v183, 8
        %v185 = vlaneseq
        %v186 = vshrl.u32 %v185, 7
        %v187 = vsub.s32 0, %v186
        %v188 = vrot.slane %v181, %v187
        %vm189 = vcmp.eq.s32.totalorder %v188, %v183
        %vm190 = vcmp.eq.s32.totalorder %v188, %v184
        %v191 = vsel %vm189, 1, 0
        %v192 = vsel %vm190, 1, 0
        %v193 = vcvt.s32.f32 %v191
        %v194 = vcvt.s32.f32 %v192
        %195 = vst [vmem:[#allocation2] sm:$0xff] %v193
        %196 = vst [vmem:[#allocation2 + $0x8] sm:$0xff] %v194
        %v197 = vlaneseq
        %v198 = vshrl.u32 %v197, 7
        %v199 = vsub.s32 1, %v198
        %v200 = vrot.slane %v181, %v199
        %vm201 = vcmp.eq.s32.totalorder %v200, %v183
        %vm202 = vcmp.eq.s32.totalorder %v200, %v184
        %v203 = vsel %vm201, 1, 0
        %v204 = vsel %vm202, 1, 0
        %v205 = vcvt.s32.f32 %v203
        %v206 = vcvt.s32.f32 %v204
        %207 = vst [vmem:[#allocation2 + $0x10] sm:$0xff] %v205
        %208 = vst [vmem:[#allocation2 + $0x18] sm:$0xff] %v206
        %v209 = vlaneseq
        %v210 = vshrl.u32 %v209, 7
        %v211 = vsub.s32 2, %v210
        %v212 = vrot.slane %v181, %v211
        %vm213 = vcmp.eq.s32.totalorder %v212, %v183
        %vm214 = vcmp.eq.s32.totalorder %v212, %v184
        %v215 = vsel %vm213, 1, 0
        %v216 = vsel %vm214, 1, 0
        %v217 = vcvt.s32.f32 %v215
        %v218 = vcvt.s32.f32 %v216
        %219 = vst [vmem:[#allocation2 + $0x20] sm:$0xff] %v217
        %220 = vst [vmem:[#allocation2 + $0x28] sm:$0xff] %v218
        %v221 = vlaneseq
        %v222 = vshrl.u32 %v221, 7
        %v223 = vsub.s32 3, %v222
        %v224 = vrot.slane %v181, %v223
        %vm225 = vcmp.eq.s32.totalorder %v224, %v183
        %vm226 = vcmp.eq.s32.totalorder %v224, %v184
        %v227 = vsel %vm225, 1, 0
        %v228 = vsel %vm226, 1, 0
        %v229 = vcvt.s32.f32 %v227
        %v230 = vcvt.s32.f32 %v228
        %231 = vst [vmem:[#allocation2 + $0x30] sm:$0xff] %v229
        %232 = vst [vmem:[#allocation2 + $0x38] sm:$0xff] %v230
        %v233 = vlaneseq
        %v234 = vshrl.u32 %v233, 7
        %v235 = vsub.s32 4, %v234
        %v236 = vrot.slane %v181, %v235
        %vm237 = vcmp.eq.s32.totalorder %v236, %v183
        %vm238 = vcmp.eq.s32.totalorder %v236, %v184
        %v239 = vsel %vm237, 1, 0
        %v240 = vsel %vm238, 1, 0
        %v241 = vcvt.s32.f32 %v239
        %v242 = vcvt.s32.f32 %v240
        %243 = vst [vmem:[#allocation2 + $0x40] sm:$0xff] %v241
        %244 = vst [vmem:[#allocation2 + $0x48] sm:$0xff] %v242
        %v245 = vlaneseq
        %v246 = vshrl.u32 %v245, 7
        %v247 = vsub.s32 5, %v246
        %v248 = vrot.slane %v181, %v247
        %vm249 = vcmp.eq.s32.totalorder %v248, %v183
        %vm250 = vcmp.eq.s32.totalorder %v248, %v184
        %v251 = vsel %vm249, 1, 0
        %v252 = vsel %vm250, 1, 0
        %v253 = vcvt.s32.f32 %v251
        %v254 = vcvt.s32.f32 %v252
        %255 = vst [vmem:[#allocation2 + $0x50] sm:$0xff] %v253
        %256 = vst [vmem:[#allocation2 + $0x58] sm:$0xff] %v254
        %v257 = vlaneseq
        %v258 = vshrl.u32 %v257, 7
        %v259 = vsub.s32 6, %v258
        %v260 = vrot.slane %v181, %v259
        %vm261 = vcmp.eq.s32.totalorder %v260, %v183
        %vm262 = vcmp.eq.s32.totalorder %v260, %v184
        %v263 = vsel %vm261, 1, 0
        %v264 = vsel %vm262, 1, 0
        %v265 = vcvt.s32.f32 %v263
        %v266 = vcvt.s32.f32 %v264
        %267 = vst [vmem:[#allocation2 + $0x60] sm:$0xff] %v265
        %268 = vst [vmem:[#allocation2 + $0x68] sm:$0xff] %v266
        %v269 = vlaneseq
        %v270 = vshrl.u32 %v269, 7
        %v271 = vsub.s32 7, %v270
        %v272 = vrot.slane %v181, %v271
        %vm273 = vcmp.eq.s32.totalorder %v272, %v183
        %vm274 = vcmp.eq.s32.totalorder %v272, %v184
        %v275 = vsel %vm273, 1, 0
        %v276 = vsel %vm274, 1, 0
        %v277 = vcvt.s32.f32 %v275
        %v278 = vcvt.s32.f32 %v276
        %279 = vst [vmem:[#allocation2 + $0x70] sm:$0xff] %v277
        %280 = vst [vmem:[#allocation2 + $0x78] sm:$0xff] %v278
        %v281 = vld [vmem:[#allocation3] sm:$0xff]
        %v282 = vld [vmem:[#allocation3 + $0x8] sm:$0xff]
        %v283 = vld [vmem:[#allocation3 + $0x10] sm:$0xff]
        %v284 = vld [vmem:[#allocation3 + $0x18] sm:$0xff]
        %v285 = vld [vmem:[#allocation3 + $0x20] sm:$0xff]
        %v286 = vld [vmem:[#allocation3 + $0x28] sm:$0xff]
        %v287 = vld [vmem:[#allocation3 + $0x30] sm:$0xff]
        %v288 = vld [vmem:[#allocation3 + $0x38] sm:$0xff]
        %v289 = vld [vmem:[#allocation3 + $0x40] sm:$0xff]
        %v290 = vld [vmem:[#allocation3 + $0x48] sm:$0xff]
        %v291 = vld [vmem:[#allocation3 + $0x50] sm:$0xff]
        %v292 = vld [vmem:[#allocation3 + $0x58] sm:$0xff]
        %v293 = vld [vmem:[#allocation3 + $0x60] sm:$0xff]
        %v294 = vld [vmem:[#allocation3 + $0x68] sm:$0xff]
        %v295 = vld [vmem:[#allocation3 + $0x70] sm:$0xff]
        %v296 = vld [vmem:[#allocation3 + $0x78] sm:$0xff]
        %v297 = vld [vmem:[#allocation3 + $0x80] sm:$0xff]
        %v298 = vld [vmem:[#allocation3 + $0x88] sm:$0xff]
        %v299 = vld [vmem:[#allocation3 + $0x90] sm:$0xff]
        %v300 = vld [vmem:[#allocation3 + $0x98] sm:$0xff]
        %v301 = vld [vmem:[#allocation3 + $0xa0] sm:$0xff]
        %v302 = vld [vmem:[#allocation3 + $0xa8] sm:$0xff]
        %v303 = vld [vmem:[#allocation3 + $0xb0] sm:$0xff]
        %v304 = vld [vmem:[#allocation3 + $0xb8] sm:$0xff]
        %v305 = vld [vmem:[#allocation2] sm:$0xff]
        %v306 = vld [vmem:[#allocation2 + $0x8] sm:$0xff]
        %v307 = vld [vmem:[#allocation2 + $0x10] sm:$0xff]
        %v308 = vld [vmem:[#allocation2 + $0x18] sm:$0xff]
        %v309 = vld [vmem:[#allocation2 + $0x20] sm:$0xff]
        %v310 = vld [vmem:[#allocation2 + $0x28] sm:$0xff]
        %v311 = vld [vmem:[#allocation2 + $0x30] sm:$0xff]
        %v312 = vld [vmem:[#allocation2 + $0x38] sm:$0xff]
        %v313 = vld [vmem:[#allocation2 + $0x40] sm:$0xff]
        %v314 = vld [vmem:[#allocation2 + $0x48] sm:$0xff]
        %v315 = vld [vmem:[#allocation2 + $0x50] sm:$0xff]
        %v316 = vld [vmem:[#allocation2 + $0x58] sm:$0xff]
        %v317 = vld [vmem:[#allocation2 + $0x60] sm:$0xff]
        %v318 = vld [vmem:[#allocation2 + $0x68] sm:$0xff]
        %v319 = vld [vmem:[#allocation2 + $0x70] sm:$0xff]
        %v320 = vld [vmem:[#allocation2 + $0x78] sm:$0xff]
        %321 = vmatprep.subr.mxu0 0.0
        %322 = vmatpush1.msra.mxu0 %v305
        %323 = vmatprep.subr.mxu0 0.0
        %324 = vmatpush1.msra.mxu0 %v306
        %325 = vmatprep.subr.mxu0 0.0
        %326 = vmatpush1.msra.mxu0 %v307
        %327 = vmatprep.subr.mxu0 0.0
        %328 = vmatpush1.msra.mxu0 %v308
        %329 = vmatprep.subr.mxu0 0.0
        %330 = vmatpush1.msra.mxu0 %v309
        %331 = vmatprep.subr.mxu0 0.0
        %332 = vmatpush1.msra.mxu0 %v310
        %333 = vmatprep.subr.mxu0 0.0
        %334 = vmatpush1.msra.mxu0 %v311
        %335 = vmatprep.subr.mxu0 0.0
        %336 = vmatpush1.msra.mxu0 %v312
        %337 = vmatprep.subr.mxu0 0.0
        %338 = vmatpush1.msra.mxu0 %v313
        %339 = vmatprep.subr.mxu0 0.0
        %340 = vmatpush1.msra.mxu0 %v314
        %341 = vmatprep.subr.mxu0 0.0
        %342 = vmatpush1.msra.mxu0 %v315
        %343 = vmatprep.subr.mxu0 0.0
        %344 = vmatpush1.msra.mxu0 %v316
        %345 = vmatprep.subr.mxu0 0.0
        %346 = vmatpush1.msra.mxu0 %v317
        %347 = vmatprep.subr.mxu0 0.0
        %348 = vmatpush1.msra.mxu0 %v318
        %349 = vmatprep.subr.mxu0 0.0
        %350 = vmatpush1.msra.mxu0 %v319
        %351 = vmatprep.subr.mxu0 0.0
        %352 = vmatpush1.msra.mxu0 %v320
        %353 = vmatprep.subr.mxu0 0.0
        %354 = vmatpush1.msra.mxu0 0.0
        %355 = vmatprep.subr.mxu0 0.0
        %356 = vmatpush1.msra.mxu0 0.0
        %357 = vmatprep.subr.mxu0 0.0
        %358 = vmatpush1.msra.mxu0 0.0
        %359 = vmatprep.subr.mxu0 0.0
        %360 = vmatpush1.msra.mxu0 0.0
        %361 = vmatprep.subr.mxu0 0.0
        %362 = vmatpush1.msra.mxu0 0.0
        %363 = vmatprep.subr.mxu0 0.0
        %364 = vmatpush1.msra.mxu0 0.0
        %365 = vmatprep.subr.mxu0 0.0
        %366 = vmatpush1.msra.mxu0 0.0
        %367 = vmatprep.subr.mxu0 0.0
        %368 = vmatpush1.msra.mxu0 0.0
        %369 = vmatprep.subr.mxu0 0.0
        %370 = vmatpush1.msra.mxu0 0.0
        %371 = vmatprep.subr.mxu0 0.0
        %372 = vmatpush1.msra.mxu0 0.0
        %373 = vmatprep.subr.mxu0 0.0
        %374 = vmatpush1.msra.mxu0 0.0
        %375 = vmatprep.subr.mxu0 0.0
        %376 = vmatpush1.msra.mxu0 0.0
        %377 = vmatprep.subr.mxu0 0.0
        %378 = vmatpush1.msra.mxu0 0.0
        %379 = vmatprep.subr.mxu0 0.0
        %380 = vmatpush1.msra.mxu0 0.0
        %381 = vmatprep.subr.mxu0 0.0
        %382 = vmatpush1.msra.mxu0 0.0
        %383 = vmatprep.subr.mxu0 0.0
        %384 = vmatpush1.msra.mxu0 0.0
        %385 = vmatprep.mubr.f32.mxu0 0.0
        %386 = vmatmul.mubr.f32.gmra.mrb[0].mxu0 %v281
        %v387 = vpop.f32.mrb[0].mxu0
        %v388 = vadd.f32 0.0, %v387
        %v389 = vpop.f32.mrb[0].mxu0
        %390 = vmatprep.mubr.f32.mxu0 0.0
        %391 = vmatmul.mubr.f32.gmra.mrb[0].mxu0 %v282
        %v392 = vpop.f32.mrb[0].mxu0
        %v393 = vadd.f32 0.0, %v392
        %v394 = vpop.f32.mrb[0].mxu0
        %395 = vmatprep.mubr.f32.mxu0 0.0
        %396 = vmatmul.mubr.f32.gmra.mrb[0].mxu0 %v283
        %v397 = vpop.f32.mrb[0].mxu0
        %v398 = vadd.f32 0.0, %v397
        %v399 = vpop.f32.mrb[0].mxu0
        %400 = vmatprep.mubr.f32.mxu0 0.0
        %401 = vmatmul.mubr.f32.gmra.mrb[0].mxu0 %v284
        %v402 = vpop.f32.mrb[0].mxu0
        %v403 = vadd.f32 0.0, %v402
        %v404 = vpop.f32.mrb[0].mxu0
        %405 = vmatprep.mubr.f32.mxu0 0.0
        %406 = vmatmul.mubr.f32.gmra.mrb[0].mxu0 %v285
        %v407 = vpop.f32.mrb[0].mxu0
        %v408 = vadd.f32 0.0, %v407
        %v409 = vpop.f32.mrb[0].mxu0
        %410 = vmatprep.mubr.f32.mxu0 0.0
        %411 = vmatmul.mubr.f32.gmra.mrb[0].mxu0 %v286
        %v412 = vpop.f32.mrb[0].mxu0
        %v413 = vadd.f32 0.0, %v412
        %v414 = vpop.f32.mrb[0].mxu0
        %415 = vmatprep.mubr.f32.mxu0 0.0
        %416 = vmatmul.mubr.f32.gmra.mrb[0].mxu0 %v287
        %v417 = vpop.f32.mrb[0].mxu0
        %v418 = vadd.f32 0.0, %v417
        %v419 = vpop.f32.mrb[0].mxu0
        %420 = vmatprep.mubr.f32.mxu0 0.0
        %421 = vmatmul.mubr.f32.gmra.mrb[0].mxu0 %v288
        %v422 = vpop.f32.mrb[0].mxu0
        %v423 = vadd.f32 0.0, %v422
        %v424 = vpop.f32.mrb[0].mxu0
        %425 = vmatprep.mubr.f32.mxu0 0.0
        %426 = vmatmul.mubr.f32.gmra.mrb[0].mxu0 %v289
        %v427 = vpop.f32.mrb[0].mxu0
        %v428 = vadd.f32 0.0, %v427
        %v429 = vpop.f32.mrb[0].mxu0
        %430 = vmatprep.mubr.f32.mxu0 0.0
        %431 = vmatmul.mubr.f32.gmra.mrb[0].mxu0 %v290
        %v432 = vpop.f32.mrb[0].mxu0
        %v433 = vadd.f32 0.0, %v432
        %v434 = vpop.f32.mrb[0].mxu0
        %435 = vmatprep.mubr.f32.mxu0 0.0
        %436 = vmatmul.mubr.f32.gmra.mrb[0].mxu0 %v291
        %v437 = vpop.f32.mrb[0].mxu0
        %v438 = vadd.f32 0.0, %v437
        %v439 = vpop.f32.mrb[0].mxu0
        %440 = vmatprep.mubr.f32.mxu0 0.0
        %441 = vmatmul.mubr.f32.gmra.mrb[0].mxu0 %v292
        %v442 = vpop.f32.mrb[0].mxu0
        %v443 = vadd.f32 0.0, %v442
        %v444 = vpop.f32.mrb[0].mxu0
        %445 = vmatprep.mubr.f32.mxu0 0.0
        %446 = vmatmul.mubr.f32.gmra.mrb[0].mxu0 %v293
        %v447 = vpop.f32.mrb[0].mxu0
        %v448 = vadd.f32 0.0, %v447
        %v449 = vpop.f32.mrb[0].mxu0
        %450 = vmatprep.mubr.f32.mxu0 0.0
        %451 = vmatmul.mubr.f32.gmra.mrb[0].mxu0 %v294
        %v452 = vpop.f32.mrb[0].mxu0
        %v453 = vadd.f32 0.0, %v452
        %v454 = vpop.f32.mrb[0].mxu0
        %455 = vmatprep.mubr.f32.mxu0 0.0
        %456 = vmatmul.mubr.f32.gmra.mrb[0].mxu0 %v295
        %v457 = vpop.f32.mrb[0].mxu0
        %v458 = vadd.f32 0.0, %v457
        %v459 = vpop.f32.mrb[0].mxu0
        %460 = vmatprep.mubr.f32.mxu0 0.0
        %461 = vmatmul.mubr.f32.gmra.mrb[0].mxu0 %v296
        %v462 = vpop.f32.mrb[0].mxu0
        %v463 = vadd.f32 0.0, %v462
        %v464 = vpop.f32.mrb[0].mxu0
        %465 = vmatprep.mubr.f32.mxu0 0.0
        %466 = vmatmul.mubr.f32.gmra.mrb[0].mxu0 %v297
        %v467 = vpop.f32.mrb[0].mxu0
        %v468 = vadd.f32 0.0, %v467
        %v469 = vpop.f32.mrb[0].mxu0
        %470 = vmatprep.mubr.f32.mxu0 0.0
        %471 = vmatmul.mubr.f32.gmra.mrb[0].mxu0 %v298
        %v472 = vpop.f32.mrb[0].mxu0
        %v473 = vadd.f32 0.0, %v472
        %v474 = vpop.f32.mrb[0].mxu0
        %475 = vmatprep.mubr.f32.mxu0 0.0
        %476 = vmatmul.mubr.f32.gmra.mrb[0].mxu0 %v299
        %v477 = vpop.f32.mrb[0].mxu0
        %v478 = vadd.f32 0.0, %v477
        %v479 = vpop.f32.mrb[0].mxu0
        %480 = vmatprep.mubr.f32.mxu0 0.0
        %481 = vmatmul.mubr.f32.gmra.mrb[0].mxu0 %v300
        %v482 = vpop.f32.mrb[0].mxu0
        %v483 = vadd.f32 0.0, %v482
        %v484 = vpop.f32.mrb[0].mxu0
        %485 = vmatprep.mubr.f32.mxu0 0.0
        %486 = vmatmul.mubr.f32.gmra.mrb[0].mxu0 %v301
        %v487 = vpop.f32.mrb[0].mxu0
        %v488 = vadd.f32 0.0, %v487
        %v489 = vpop.f32.mrb[0].mxu0
        %490 = vmatprep.mubr.f32.mxu0 0.0
        %491 = vmatmul.mubr.f32.gmra.mrb[0].mxu0 %v302
        %v492 = vpop.f32.mrb[0].mxu0
        %v493 = vadd.f32 0.0, %v492
        %v494 = vpop.f32.mrb[0].mxu0
        %495 = vmatprep.mubr.f32.mxu0 0.0
        %496 = vmatmul.mubr.f32.gmra.mrb[0].mxu0 %v303
        %v497 = vpop.f32.mrb[0].mxu0
        %v498 = vadd.f32 0.0, %v497
        %v499 = vpop.f32.mrb[0].mxu0
        %500 = vmatprep.mubr.f32.mxu0 0.0
        %501 = vmatmul.mubr.f32.gmra.mrb[0].mxu0 %v304
        %v502 = vpop.f32.mrb[0].mxu0
        %v503 = vadd.f32 0.0, %v502
        %v504 = vpop.f32.mrb[0].mxu0
        %505 = vdwg.mxu0
        %v506 = vmax.f32 %v388, %v408
        %v507 = vmax.f32 %v393, %v413
        %v508 = vmax.f32 %v398, %v418
        %v509 = vmax.f32 %v403, %v423
        %v510 = vmax.f32 %v506, %v428
        %v511 = vmax.f32 %v507, %v433
        %v512 = vmax.f32 %v508, %v438
        %v513 = vmax.f32 %v509, %v443
        %v514 = vmax.f32 %v510, %v448
        %v515 = vmax.f32 %v511, %v453
        %v516 = vmax.f32 %v512, %v458
        %v517 = vmax.f32 %v513, %v463
        %v518 = vmax.f32 %v514, %v468
        %v519 = vmax.f32 %v515, %v473
        %v520 = vmax.f32 %v516, %v478
        %v521 = vmax.f32 %v517, %v483
        %v522 = vmax.f32 %v518, %v488
        %v523 = vmax.f32 %v519, %v493
        %v524 = vmax.f32 %v520, %v498
        %v525 = vmax.f32 %v521, %v503
        %v526 = vld [vmem:[%s2] sm:$0xff]
        %v527 = vld [vmem:[%s2 + $0x8] sm:$0xff]
        %v528 = vld [vmem:[%s2 + $0x10] sm:$0xff]
        %v529 = vld [vmem:[%s2 + $0x18] sm:$0xff]
        %531 = vset.pattern.permute.xlu0 0
        %532 = vperm.xlu0 %531, %v526
        %v533 = vpop.permute.xlu0 %532
        %536 = vset.pattern.permute.xlu0 0
        %537 = vperm.xlu0 %536, %v527
        %v538 = vpop.permute.xlu0 %537
        %541 = vset.pattern.permute.xlu0 0
        %542 = vperm.xlu0 %541, %v528
        %v543 = vpop.permute.xlu0 %542
        %546 = vset.pattern.permute.xlu0 0
        %547 = vperm.xlu0 %546, %v529
        %v548 = vpop.permute.xlu0 %547
        %v550 = vadd.f32 %v522, %v533
        %v551 = vadd.f32 %v523, %v538
        %v552 = vadd.f32 %v524, %v543
        %v553 = vadd.f32 %v525, %v548
        %554 = vst [vmem:[%s176] sm:$0xff] %v550
        %555 = vst [vmem:[%s176 + $0x8] sm:$0xff] %v551
        %556 = vst [vmem:[%s176 + $0x10] sm:$0xff] %v552
        %557 = vst [vmem:[%s176 + $0x18] sm:$0xff] %v553
        %s558 = sand.u32 %s94, 1
        %s559 = scalar_lea.sflag [#allocation5], %s558
        %s560 = sand.u32 %s94, 1
        %s561 = smul.addr %s560, 32
        %s562 = scalar_lea.vmem [#allocation6], %s561
        // Predicated region
        $region37: #{tpu_custom_call.1} parent=31 // pred_check
          %p563 = pneg %p104
        $region38: #{tpu_custom_call.1} parent=31 // pred_check_branch
          %565 = sbr.rel (%p563) target = $region40
        $region39: #{tpu_custom_call.1} parent=31 // pred_region
          %s567 = ssub.s32 512, 512
          %568 = vsyncadd %s559, %s567
          %s569 = smul.addr %s18, 128
          %s570 = scalar_lea.hbm %s3, %s569
          %s571 = sshll.u32 %s562, 4
          %s572 = int_to_ptr.vmem [resolvable:$true] %s571
          %577 = dma.vmem_to_hbm [thread:$0]  %s572, 512, %s570, %s559, 128, 256, 8
        $region40: #{tpu_custom_call.1} parent=31 // pred_fallthru
          _
      $region32: #{tpu_custom_call.1} parent=5 // pred_fallthru
        _
      %p578 = scmp.le.s32.totalorder 2, %s13
      // Predicated region
      $region41: #{tpu_custom_call.1} parent=5 // pred_check
        %p579 = pneg %p578
      $region42: #{tpu_custom_call.1} parent=5 // pred_check_branch
        %581 = sbr.rel (%p579) target = $region44
      $region43: #{tpu_custom_call.1} parent=5 // pred_region
        %s582 = ssub.s32 %s13, 2
        // Predicated region
        $region45: #{tpu_custom_call.1} parent=43 // pred_check
          %p583 = pneg %p110
        $region46: #{tpu_custom_call.1} parent=43 // pred_check_branch
          %585 = sbr.rel (%p583) target = $region48
        $region47: #{tpu_custom_call.1} parent=43 // pred_region
          %s586 = sand.u32 %s95, 1
          %s587 = scalar_lea.sflag [#allocation5], %s586
          %s588 = sand.u32 %s95, 1
          %s589 = smul.addr %s588, 32
          %s590 = scalar_lea.vmem [#allocation6], %s589
          %591 = dma.done %s587, 512
        $region48: #{tpu_custom_call.1} parent=43 // pred_fallthru
          _
      $region44: #{tpu_custom_call.1} parent=5 // pred_fallthru
        _
    $region6: #{tpu_custom_call.1} parent=1 // loop_footer
      %s17 = sadd.s32 1, %s13
    $region7: #{tpu_custom_call.1} parent=1 // loop_footer_branch
      %12 = sbr.rel target = $region3
    $region8: #{tpu_custom_call.1} parent=1 // loop_exit
      _
    %592 = vsyncpa [#allocation4], 1
    %s593 = scalar_lea.sflag [#allocation4], 1
    %594 = vsyncpa %s593, 1
    %595 = vsyncpa [#allocation5], 1
    %s596 = scalar_lea.sflag [#allocation5], 1
    %597 = vsyncpa %s596, 1

</llo_original>
